<compile_context>
chip_gen: v5e
topology: v5e:2x2
jax: 0.10.0
libtpu: 0.0.40
codegen_flags: <defaults>
</compile_context>

<pallas_src>
import jax
import jax.numpy as jnp
from jax import lax
from jax.experimental import pallas as pl
from jax.experimental.pallas import tpu as pltpu


# ----------------------------------------------------------------------------
# Pallas kernel (fused stitch BCE + edge-cls focal loss, per (batch-block, row-tile))
# ----------------------------------------------------------------------------
def _fused_loss_kernel(sim_ref, adj_ref, row_ok_ref, col_ok_ref, logits_ref,
                       sloss_ref, shit_ref, focal_ref, ccorr_ref):
    ti = pl.program_id(1)
    tb, tq, q = sim_ref.shape

    # ---- stitch branch: masked BCE-with-logits over a (TB, TQ, Q) tile ----
    x = sim_ref[...].astype(jnp.float32)
    t = adj_ref[...].astype(jnp.float32)
    row_ok = row_ok_ref[...].astype(jnp.float32)            # (TB, TQ, 1), 1.0 = valid
    col_ok = col_ok_ref[...].astype(jnp.float32)            # (TB, 1, Q),  1.0 = valid

    # Diagonal exclusion via broadcasted compare of two *thin* iotas (no full-tile
    # int32 iotas, no extra mask multiply) -- trims VALU work per perf review.
    rows = ti * tq + lax.broadcasted_iota(jnp.int32, (1, tq, 1), 1)
    cols = lax.broadcasted_iota(jnp.int32, (1, 1, q), 2)
    valid = jnp.where(rows == cols, 0.0, row_ok * col_ok)   # (TB, TQ, Q)

    # Numerically-stable BCE with logits; sigmoid(x) > 0.5  <=>  x > 0, so the
    # accuracy needs no sigmoid at all.
    bce = jnp.maximum(x, 0.0) - x * t + jnp.log1p(jnp.exp(-jnp.abs(x)))
    hit = jnp.where((x > 0.0) == (t > 0.5), valid, 0.0)

    @pl.when(ti == 0)
    def _():
        # zero the per-batch-block resident accumulators
        sloss_ref[...] = jnp.zeros_like(sloss_ref)
        shit_ref[...] = jnp.zeros_like(shit_ref)

        # ---- edge-cls branch: sigmoid focal (alpha=0.25, gamma=2), once per block ----
        xl = logits_ref[...].astype(jnp.float32)             # (TB, 1, Q)
        tl = col_ok                                          # gt = 1 - free_mask
        e = jnp.exp(-jnp.abs(xl))
        bcel = jnp.maximum(xl, 0.0) - xl * tl + jnp.log1p(e)
        p = jnp.where(xl >= 0.0, 1.0, e) / (1.0 + e)         # exact sigmoid (one exp)
        p_t = p * tl + (1.0 - p) * (1.0 - tl)
        alpha_t = 0.25 * tl + 0.75 * (1.0 - tl)
        focal = alpha_t * bcel * (1.0 - p_t) ** 2            # gamma = 2
        focal_ref[...] = jnp.zeros_like(focal_ref) + jnp.sum(focal)
        ccorr_ref[...] = jnp.zeros_like(ccorr_ref) + jnp.sum(
            jnp.where((xl > 0.0) == (tl > 0.5), 1.0, 0.0))

    # accumulate into resident output blocks (revisited along the "arbitrary" ti axis)
    sloss_ref[...] += jnp.sum(valid * bce)
    shit_ref[...] += jnp.sum(hit)


# ----------------------------------------------------------------------------
# Tile selection + pallas_call wrapper
# ----------------------------------------------------------------------------
def _choose_tiles(batch, q):
    """(TB, TQ): fold batch rows for small Q, otherwise row-tile up to 512 rows (~4 MiB)."""
    budget_elems = 1 << 20                      # ~1M elems per operand block (~4 MiB @ f32)
    if q * q <= budget_elems:
        tq = q
        tb = 1
        for cand in range(1, batch + 1):        # largest divisor of B fitting the budget
            if batch % cand == 0 and cand * q * q <= budget_elems:
                tb = cand
        return tb, tq
    cap = int(min(512, max(8, budget_elems // q)))
    tq = None
    for t in range(8, cap + 1, 8):              # largest multiple-of-8 divisor of Q <= cap
        if q % t == 0:
            tq = t
    return 1, (tq if tq is not None else q)     # fallback: full-Q rows


def fused_edge_and_stitch_losses(edge_logits, sim, adj, free_mask_f32):
    """edge_logits (B,Q), sim/adj (B,Q,Q) in their native dtypes, free_mask_f32 (B,Q) 1.0=free."""
    B, Q, _ = sim.shape
    tb, tq = _choose_tiles(B, Q)
    nb, nt = B // tb, Q // tq

    ok = 1.0 - free_mask_f32                    # (B, Q) tiny wrapper op
    row_ok = ok.reshape(B, Q, 1)
    col_ok = ok.reshape(B, 1, Q)
    logits3 = edge_logits.reshape(B, 1, Q)

    blk_elems = tb * tq * Q
    in_blk_bytes = blk_elems * (jnp.dtype(sim.dtype).itemsize + jnp.dtype(adj.dtype).itemsize)
    # 2x double-buffered inputs + ~4 f32 element-wise temps + headroom; v7x-safe cap.
    vmem_limit = int(min(48 * 2**20,
                         max(16 * 2**20, 2 * in_blk_bytes + 16 * blk_elems + 4 * 2**20)))

    elems = B * Q * Q
    cost = pl.CostEstimate(
        flops=int(14 * elems + 40 * B * Q),
        transcendentals=int(2 * elems + 3 * B * Q),
        bytes_accessed=int(sim.nbytes + adj.nbytes + 3 * B * Q * 4 + 4 * nb * 8 * 128 * 4),
    )

    # Per-batch-block scalar accumulators, padded to a full (8,128) VMEM tile so stores are
    # unmasked and block shapes trivially satisfy layout rules; wrapper reads [.., 0, 0].
    part_spec = pl.BlockSpec((1, 1, 8, 128), lambda bi, ti: (bi, 0, 0, 0))
    part_shape = jax.ShapeDtypeStruct((nb, 1, 8, 128), jnp.float32)

    sloss_p, shit_p, focal_p, ccorr_p = pl.pallas_call(
        _fused_loss_kernel,
        grid=(nb, nt),
        in_specs=[
            pl.BlockSpec((tb, tq, Q), lambda bi, ti: (bi, ti, 0)),   # similarity block
            pl.BlockSpec((tb, tq, Q), lambda bi, ti: (bi, ti, 0)),   # adjacency block
            pl.BlockSpec((tb, tq, 1), lambda bi, ti: (bi, ti, 0)),   # valid-mask rows
            pl.BlockSpec((tb, 1, Q), lambda bi, ti: (bi, 0, 0)),     # valid-mask cols (resident)
            pl.BlockSpec((tb, 1, Q), lambda bi, ti: (bi, 0, 0)),     # edge-cls logits (resident)
        ],
        out_specs=(part_spec, part_spec, part_spec, part_spec),
        out_shape=(part_shape, part_shape, part_shape, part_shape),
        compiler_params=pltpu.CompilerParams(
            # batch-block axis is independent across iterations -> "parallel" (v7x dual-TC),
            # row-tile axis revisits the output accumulators -> "arbitrary".
            dimension_semantics=("parallel", "arbitrary"),
            vmem_limit_bytes=vmem_limit,
        ),
        cost_estimate=cost,
    )(sim, adj, row_ok, col_ok, logits3)

    n_cls = float(B * Q)
    focal_mean = jnp.sum(focal_p[:, 0, 0, 0]) / n_cls
    cls_acc = jnp.sum(ccorr_p[:, 0, 0, 0]) / n_cls

    # Valid-pair count computed analytically from the (B, Q) mask instead of a third
    # full (B, Q, Q) reduction: v_b = #non-free edges, count = sum_b (v_b^2 - v_b).
    v = Q - jnp.sum(free_mask_f32, axis=1)
    count = jnp.sum(v * v - v)
    denom = jnp.maximum(count, 1.0)
    st_loss = jnp.where(count > 0, jnp.sum(sloss_p[:, 0, 0, 0]) / denom, 0.0)
    st_acc = jnp.where(count > 0, jnp.sum(shit_p[:, 0, 0, 0]) / denom, 1.0)
    return focal_mean, cls_acc, st_loss, st_acc


# ----------------------------------------------------------------------------
# Module-equivalent wrappers
# ----------------------------------------------------------------------------
def _prepare_stitch_targets(similarity_matrix, gt_matrix, gt_free_mask):
    """Static-shape fix-ups from the PyTorch StitchLoss (pad/truncate adj & mask)."""
    B, Q, _ = similarity_matrix.shape
    g = gt_matrix.shape[1]
    if g != Q:
        if g > Q:
            gt_matrix = gt_matrix[:, :Q, :Q]
        else:
            pad = Q - g
            gt_matrix = jnp.pad(gt_matrix, ((0, 0), (0, pad), (0, pad)))
    if gt_free_mask is None:
        free = jnp.zeros((B, Q), jnp.float32)
    else:
        fm = gt_free_mask.reshape(gt_free_mask.shape[0], -1).astype(jnp.float32)
        E = fm.shape[1]
        if E < Q:
            fm = jnp.concatenate([fm, jnp.ones((B, Q - E), jnp.float32)], axis=1)
        elif E > Q:
            fm = fm[:, :Q]
        free = fm
    return gt_matrix, free


class StitchLoss:
    """Standalone masked BCE-with-logits over the (B, Q, Q) similarity matrix."""

    def __call__(self, similarity_matrix, gt_matrix, gt_free_mask=None):
        adj, free = _prepare_stitch_targets(similarity_matrix, gt_matrix, gt_free_mask)
        B, Q, _ = similarity_matrix.shape
        # Reuse the fused kernel; edge-cls outputs on zero logits are discarded.
        _, _, st_loss, st_acc = fused_edge_and_stitch_losses(
            jnp.zeros((B, Q), jnp.float32), similarity_matrix, adj, free)
        return st_loss, st_acc


class SetCriterionWithOutMatcher:
    def __init__(self, data_config=None, in_config=None):
        self.config = {'loss': {
            'loss_components': ['shape', 'loop', 'rotation', 'translation'],
            'quality_components': ['shape', 'discrete', 'rotation', 'translation'],
            'panel_origin_invariant_loss': True,
            'loop_loss_weight': 1.0, 'stitch_tags_margin': 0.3,
            'epoch_with_stitches': 10000, 'stitch_supervised_weight': 0.1,
            'stitch_hardnet_version': False,
            'lepoch': 0,   # enable the stitch branch
        }}
        if in_config:
            self.config['loss'].update(in_config)
        self.stitch_loss = StitchLoss()

    def __call__(self, outputs, ground_truth, names=None, epoch=1000):
        b = outputs['outlines'].shape[0]
        q = outputs['rotations'].shape[1]
        outputs['outlines'] = outputs['outlines'].reshape(b, q, -1, 4)
        # TODO(synk): ComposedPatternLoss is an external dependency not provided with the
        # module; its contribution is taken as 0 here (only the stitch branch is modeled).
        full_loss = jnp.float32(0.0)
        loss_dict = {}

        if ('edge_cls' in outputs and 'lepoch' in self.config['loss']
                and epoch >= self.config['loss']['lepoch']):
            edge_cls = outputs['edge_cls'][..., 0]               # squeeze(-1) -> (B, Q)
            sim = outputs['edge_similarity']
            # NOTE: edge_cls and edge_similarity share the same edge queries, so the
            # flattened free_edges_mask doubles as the edge-cls ground truth (1 - mask)
            # inside the fused kernel (matches the PyTorch target construction when the
            # flattened mask width equals the number of edge queries).
            adj, free = _prepare_stitch_targets(sim, ground_truth['stitch_adj'],
                                                ground_truth['free_edges_mask'])
            focal_mean, cls_acc, st_loss, st_acc = fused_edge_and_stitch_losses(
                edge_cls, sim, adj, free)

            full_loss = full_loss * 5.0
            loss_dict['stitch_cls_loss'] = 0.5 * focal_mean
            loss_dict['stitch_edge_cls_acc'] = cls_acc
            full_loss = full_loss + loss_dict['stitch_cls_loss']
            loss_dict['stitch_loss'] = 0.05 * st_loss
            loss_dict['stitch_acc'] = st_acc
            full_loss = full_loss + loss_dict['stitch_loss']

            if 'smpl_joints' in ground_truth and 'smpl_joints' in outputs:
                jl = jnp.mean((outputs['smpl_joints'] -
                               ground_truth['smpl_joints']) ** 2)
                loss_dict['smpl_joint_loss'] = jl
                full_loss = full_loss + jl
        return full_loss, loss_dict


# ----------------------------------------------------------------------------
# Pure-JAX reference (correctness check of the Pallas kernel)
# ----------------------------------------------------------------------------
def _ref_losses(edge_cls, edge_cls_gt, sim, adj, free_mask):
    x, t = edge_cls, edge_cls_gt
    bce = jnp.maximum(x, 0.) - x * t + jnp.log1p(jnp.exp(-jnp.abs(x)))
    p = jax.nn.sigmoid(x)
    p_t = p * t + (1 - p) * (1 - t)
    focal = jnp.mean((0.25 * t + 0.75 * (1 - t)) * bce * (1 - p_t) ** 2)
    acc = jnp.mean(((p > 0.5).astype(jnp.float32) == t).astype(jnp.float32))

    B, Q, _ = sim.shape
    valid = (~(free_mask[:, :, None] | free_mask[:, None, :])) & (~jnp.eye(Q, dtype=bool)[None])
    v = valid.astype(jnp.float32)
    bce2 = jnp.maximum(sim, 0.) - sim * adj + jnp.log1p(jnp.exp(-jnp.abs(sim)))
    hit = ((jax.nn.sigmoid(sim) > 0.5) == (adj > 0.5)).astype(jnp.float32)
    cnt = jnp.sum(v)
    st_loss = jnp.sum(v * bce2) / cnt
    st_acc = jnp.sum(v * hit) / cnt
    return focal, acc, st_loss, st_acc


if __name__ == "__main__":
    key = jax.random.PRNGKey(0)
    B, P, E = 2, 4, 8           # batch, panel queries, edges per panel
    Q = P * E                   # edge queries = 32

    k1, k2, k3, k4, k5, k6 = jax.random.split(key, 6)
    outputs = {
        'outlines': jax.random.normal(k1, (B, P, E * 4), jnp.float32),
        'rotations': jax.random.normal(k2, (B, P, 4), jnp.float32),
        'translations': jax.random.normal(k3, (B, P, 3), jnp.float32),
        'edge_cls': jax.random.normal(k4, (B, Q, 1), jnp.float32),
        'edge_similarity': jax.random.normal(k5, (B, Q, Q), jnp.float32),
    }
    free_edges_mask = jax.random.bernoulli(k6, 0.3, (B, P, E))
    stitch_adj = jax.random.bernoulli(jax.random.fold_in(key, 7), 0.1,
                                      (B, Q, Q)).astype(jnp.float32)
    ground_truth = {
        'free_edges_mask': free_edges_mask,
        'stitch_adj': stitch_adj,
    }

    criterion = SetCriterionWithOutMatcher()
    full_loss, loss_dict = criterion(outputs, ground_truth, epoch=1000)
    jax.block_until_ready(full_loss)
    for v in loss_dict.values():
        jax.block_until_ready(v)

    # correctness check against a pure-JAX reference
    ref_focal, ref_acc, ref_sloss, ref_sacc = _ref_losses(
        outputs['edge_cls'][..., 0],
        (~free_edges_mask.reshape(B, -1)).astype(jnp.float32),
        outputs['edge_similarity'], stitch_adj, free_edges_mask.reshape(B, -1))
    assert jnp.allclose(loss_dict['stitch_cls_loss'], 0.5 * ref_focal, rtol=2e-3, atol=1e-5)
    assert jnp.allclose(loss_dict['stitch_edge_cls_acc'], ref_acc, atol=1e-5)
    assert jnp.allclose(loss_dict['stitch_loss'], 0.05 * ref_sloss, rtol=1e-4, atol=1e-5)
    assert jnp.allclose(loss_dict['stitch_acc'], ref_sacc, atol=1e-5)
    assert jnp.allclose(full_loss, 0.5 * ref_focal + 0.05 * ref_sloss, rtol=2e-3, atol=1e-5)

    print("KERNEL_OK")
</pallas_src>

<mosaic_0001>
module attributes {stable_mosaic.version = 11 : i64} {
  func.func @_fused_loss_kernel(%arg0: i32, %arg1: i32, %arg2: memref<2x32x32xf32, #tpu.memory_space<vmem>>, %arg3: memref<2x32x32xf32, #tpu.memory_space<vmem>>, %arg4: memref<2x32x1xf32, #tpu.memory_space<vmem>>, %arg5: memref<2x1x32xf32, #tpu.memory_space<vmem>>, %arg6: memref<2x1x32xf32, #tpu.memory_space<vmem>>, %arg7: memref<1x1x8x128xf32, #tpu.memory_space<vmem>>, %arg8: memref<1x1x8x128xf32, #tpu.memory_space<vmem>>, %arg9: memref<1x1x8x128xf32, #tpu.memory_space<vmem>>, %arg10: memref<1x1x8x128xf32, #tpu.memory_space<vmem>>) attributes {dimension_semantics = [#tpu.dimension_semantics<parallel>, #tpu.dimension_semantics<arbitrary>], iteration_bounds = array<i64: 1, 1>, scalar_prefetch = 0 : i64, scratch_operands = 0 : i64, tpu.core_type = #tpu.core_type<tc>, window_params = [{transform_indices = @transform_0, window_bounds = array<i64: 2, 32, 32>}, {transform_indices = @transform_1, window_bounds = array<i64: 2, 32, 32>}, {transform_indices = @transform_2, window_bounds = array<i64: 2, 32, 1>}, {transform_indices = @transform_3, window_bounds = array<i64: 2, 1, 32>}, {transform_indices = @transform_4, window_bounds = array<i64: 2, 1, 32>}, {transform_indices = @transform_5, window_bounds = array<i64: 1, 1, 8, 128>}, {transform_indices = @transform_6, window_bounds = array<i64: 1, 1, 8, 128>}, {transform_indices = @transform_7, window_bounds = array<i64: 1, 1, 8, 128>}, {transform_indices = @transform_8, window_bounds = array<i64: 1, 1, 8, 128>}]} {
    %c0 = arith.constant 0 : index
    %c0_0 = arith.constant 0 : index
    %c0_1 = arith.constant 0 : index
    %0 = vector.load %arg2[%c0, %c0_0, %c0_1] : memref<2x32x32xf32, #tpu.memory_space<vmem>>, vector<2x32x32xf32>
    %c0_2 = arith.constant 0 : index
    %c0_3 = arith.constant 0 : index
    %c0_4 = arith.constant 0 : index
    %1 = vector.load %arg3[%c0_2, %c0_3, %c0_4] : memref<2x32x32xf32, #tpu.memory_space<vmem>>, vector<2x32x32xf32>
    %c0_5 = arith.constant 0 : index
    %c0_6 = arith.constant 0 : index
    %c0_7 = arith.constant 0 : index
    %2 = vector.load %arg4[%c0_5, %c0_6, %c0_7] : memref<2x32x1xf32, #tpu.memory_space<vmem>>, vector<2x32x1xf32>
    %c0_8 = arith.constant 0 : index
    %c0_9 = arith.constant 0 : index
    %c0_10 = arith.constant 0 : index
    %3 = vector.load %arg5[%c0_8, %c0_9, %c0_10] : memref<2x1x32xf32, #tpu.memory_space<vmem>>, vector<2x1x32xf32>
    %c32_i32 = arith.constant 32 : i32
    %4 = arith.muli %arg1, %c32_i32 : i32
    %5 = tpu.iota {dimensions = array<i32: 1>} : vector<1x32x1xi32>
    %6 = vector.broadcast %4 : i32 to vector<1x32x1xi32>
    %7 = arith.addi %6, %5 : vector<1x32x1xi32>
    %8 = tpu.iota {dimensions = array<i32: 2>} : vector<1x1x32xi32>
    %9 = vector.broadcast %7 : vector<1x32x1xi32> to vector<1x32x32xi32>
    %10 = vector.broadcast %8 : vector<1x1x32xi32> to vector<1x32x32xi32>
    %11 = arith.cmpi eq, %9, %10 : vector<1x32x32xi32>
    %12 = vector.broadcast %2 : vector<2x32x1xf32> to vector<2x32x32xf32>
    %13 = vector.broadcast %3 : vector<2x1x32xf32> to vector<2x32x32xf32>
    %14 = arith.mulf %12, %13 : vector<2x32x32xf32>
    %cst = arith.constant 0.000000e+00 : f32
    %15 = vector.shape_cast %11 : vector<1x32x32xi1> to vector<1x32x32xi1>
    %16 = vector.broadcast %15 : vector<1x32x32xi1> to vector<2x32x32xi1>
    %17 = vector.broadcast %cst : f32 to vector<2x32x32xf32>
    %18 = arith.select %16, %17, %14 : vector<2x32x32xi1>, vector<2x32x32xf32>
    %cst_11 = arith.constant 0.000000e+00 : f32
    %19 = vector.broadcast %cst_11 : f32 to vector<2x32x32xf32>
    %20 = arith.maximumf %0, %19 : vector<2x32x32xf32>
    %21 = arith.mulf %0, %1 : vector<2x32x32xf32>
    %22 = arith.subf %20, %21 : vector<2x32x32xf32>
    %23 = math.absf %0 : vector<2x32x32xf32>
    %cst_12 = arith.constant 0.000000e+00 : f32
    %24 = vector.broadcast %cst_12 : f32 to vector<2x32x32xf32>
    %25 = arith.subf %24, %23 : vector<2x32x32xf32>
    %26 = math.exp %25 : vector<2x32x32xf32>
    %27 = math.log1p %26 : vector<2x32x32xf32>
    %28 = arith.addf %22, %27 : vector<2x32x32xf32>
    %cst_13 = arith.constant 0.000000e+00 : f32
    %29 = vector.broadcast %cst_13 : f32 to vector<2x32x32xf32>
    %30 = arith.cmpf ogt, %0, %29 : vector<2x32x32xf32>
    %cst_14 = arith.constant 5.000000e-01 : f32
    %31 = vector.broadcast %cst_14 : f32 to vector<2x32x32xf32>
    %32 = arith.cmpf ogt, %1, %31 : vector<2x32x32xf32>
    %33 = arith.xori %30, %32 : vector<2x32x32xi1>
    %cst_15 = arith.constant dense<true> : vector<2x32x32xi1>
    %34 = arith.xori %33, %cst_15 : vector<2x32x32xi1>
    %cst_16 = arith.constant 0.000000e+00 : f32
    %35 = vector.broadcast %cst_16 : f32 to vector<2x32x32xf32>
    %36 = arith.select %34, %18, %35 : vector<2x32x32xi1>, vector<2x32x32xf32>
    %c0_i32 = arith.constant 0 : i32
    %37 = arith.cmpi eq, %arg1, %c0_i32 : i32
    %38 = arith.extui %37 : i1 to i32
    %c0_i32_17 = arith.constant 0 : i32
    %39 = arith.cmpi ne, %38, %c0_i32_17 : i32
    scf.if %39 {
      %cst_36 = arith.constant 0.000000e+00 : f32
      %57 = vector.broadcast %cst_36 : f32 to vector<1x1x8x128xf32>
      %c0_37 = arith.constant 0 : index
      %c0_38 = arith.constant 0 : index
      %c0_39 = arith.constant 0 : index
      %c0_40 = arith.constant 0 : index
      %58 = vector.load %arg7[%c0_37, %c0_38, %c0_39, %c0_40] : memref<1x1x8x128xf32, #tpu.memory_space<vmem>>, vector<1x1x8x128xf32>
      tpu.vector_store %arg7[%c0_37, %c0_38, %c0_39, %c0_40], %57 {strides = array<i32>} : memref<1x1x8x128xf32, #tpu.memory_space<vmem>>, vector<1x1x8x128xf32>,
      %cst_41 = arith.constant 0.000000e+00 : f32
      %59 = vector.broadcast %cst_41 : f32 to vector<1x1x8x128xf32>
      %c0_42 = arith.constant 0 : index
      %c0_43 = arith.constant 0 : index
      %c0_44 = arith.constant 0 : index
      %c0_45 = arith.constant 0 : index
      %60 = vector.load %arg8[%c0_42, %c0_43, %c0_44, %c0_45] : memref<1x1x8x128xf32, #tpu.memory_space<vmem>>, vector<1x1x8x128xf32>
      tpu.vector_store %arg8[%c0_42, %c0_43, %c0_44, %c0_45], %59 {strides = array<i32>} : memref<1x1x8x128xf32, #tpu.memory_space<vmem>>, vector<1x1x8x128xf32>,
      %c0_46 = arith.constant 0 : index
      %c0_47 = arith.constant 0 : index
      %c0_48 = arith.constant 0 : index
      %61 = vector.load %arg6[%c0_46, %c0_47, %c0_48] : memref<2x1x32xf32, #tpu.memory_space<vmem>>, vector<2x1x32xf32>
      %62 = math.absf %61 : vector<2x1x32xf32>
      %cst_49 = arith.constant 0.000000e+00 : f32
      %63 = vector.broadcast %cst_49 : f32 to vector<2x1x32xf32>
      %64 = arith.subf %63, %62 : vector<2x1x32xf32>
      %65 = math.exp %64 : vector<2x1x32xf32>
      %cst_50 = arith.constant 0.000000e+00 : f32
      %66 = vector.broadcast %cst_50 : f32 to vector<2x1x32xf32>
      %67 = arith.maximumf %61, %66 : vector<2x1x32xf32>
      %68 = arith.mulf %61, %3 : vector<2x1x32xf32>
      %69 = arith.subf %67, %68 : vector<2x1x32xf32>
      %70 = math.log1p %65 : vector<2x1x32xf32>
      %71 = arith.addf %69, %70 : vector<2x1x32xf32>
      %cst_51 = arith.constant 0.000000e+00 : f32
      %72 = vector.broadcast %cst_51 : f32 to vector<2x1x32xf32>
      %73 = arith.cmpf oge, %61, %72 : vector<2x1x32xf32>
      %cst_52 = arith.constant 1.000000e+00 : f32
      %74 = vector.broadcast %cst_52 : f32 to vector<2x1x32xf32>
      %75 = arith.select %73, %74, %65 : vector<2x1x32xi1>, vector<2x1x32xf32>
      %cst_53 = arith.constant 1.000000e+00 : f32
      %76 = vector.broadcast %cst_53 : f32 to vector<2x1x32xf32>
      %77 = arith.addf %76, %65 : vector<2x1x32xf32>
      %78 = arith.divf %75, %77 : vector<2x1x32xf32>
      %79 = arith.mulf %78, %3 : vector<2x1x32xf32>
      %cst_54 = arith.constant 1.000000e+00 : f32
      %80 = vector.broadcast %cst_54 : f32 to vector<2x1x32xf32>
      %81 = arith.subf %80, %78 : vector<2x1x32xf32>
      %cst_55 = arith.constant 1.000000e+00 : f32
      %82 = vector.broadcast %cst_55 : f32 to vector<2x1x32xf32>
      %83 = arith.subf %82, %3 : vector<2x1x32xf32>
      %84 = arith.mulf %81, %83 : vector<2x1x32xf32>
      %85 = arith.addf %79, %84 : vector<2x1x32xf32>
      %cst_56 = arith.constant 2.500000e-01 : f32
      %86 = vector.broadcast %cst_56 : f32 to vector<2x1x32xf32>
      %87 = arith.mulf %86, %3 : vector<2x1x32xf32>
      %cst_57 = arith.constant 1.000000e+00 : f32
      %88 = vector.broadcast %cst_57 : f32 to vector<2x1x32xf32>
      %89 = arith.subf %88, %3 : vector<2x1x32xf32>
      %cst_58 = arith.constant 7.500000e-01 : f32
      %90 = vector.broadcast %cst_58 : f32 to vector<2x1x32xf32>
      %91 = arith.mulf %90, %89 : vector<2x1x32xf32>
      %92 = arith.addf %87, %91 : vector<2x1x32xf32>
      %93 = arith.mulf %92, %71 : vector<2x1x32xf32>
      %cst_59 = arith.constant 1.000000e+00 : f32
      %94 = vector.broadcast %cst_59 : f32 to vector<2x1x32xf32>
      %95 = arith.subf %94, %85 : vector<2x1x32xf32>
      %96 = arith.mulf %95, %95 : vector<2x1x32xf32>
      %97 = arith.mulf %93, %96 : vector<2x1x32xf32>
      %cst_60 = arith.constant 0.000000e+00 : f32
      %98 = vector.broadcast %cst_60 : f32 to vector<1x1x8x128xf32>
      %99 = vector.shape_cast %97 : vector<2x1x32xf32> to vector<1x2x1x32xf32>
      %cst_61 = arith.constant dense<0.000000e+00> : vector<1xf32>
      %100 = vector.multi_reduction <add>, %99, %cst_61 [1, 2, 3] : vector<1x2x1x32xf32> to vector<1xf32>
      %101 = vector.shape_cast %100 : vector<1xf32> to vector<1x1x1x1xf32>
      %102 = vector.extract %101[0, 0, 0, 0] : f32 from vector<1x1x1x1xf32>
      %103 = vector.broadcast %102 : f32 to vector<1x1x8x128xf32>
      %104 = arith.addf %98, %103 : vector<1x1x8x128xf32>
      %c0_62 = arith.constant 0 : index
      %c0_63 = arith.constant 0 : index
      %c0_64 = arith.constant 0 : index
      %c0_65 = arith.constant 0 : index
      %105 = vector.load %arg9[%c0_62, %c0_63, %c0_64, %c0_65] : memref<1x1x8x128xf32, #tpu.memory_space<vmem>>, vector<1x1x8x128xf32>
      tpu.vector_store %arg9[%c0_62, %c0_63, %c0_64, %c0_65], %104 {strides = array<i32>} : memref<1x1x8x128xf32, #tpu.memory_space<vmem>>, vector<1x1x8x128xf32>,
      %cst_66 = arith.constant 0.000000e+00 : f32
      %106 = vector.broadcast %cst_66 : f32 to vector<1x1x8x128xf32>
      %cst_67 = arith.constant 0.000000e+00 : f32
      %107 = vector.broadcast %cst_67 : f32 to vector<2x1x32xf32>
      %108 = arith.cmpf ogt, %61, %107 : vector<2x1x32xf32>
      %cst_68 = arith.constant 5.000000e-01 : f32
      %109 = vector.broadcast %cst_68 : f32 to vector<2x1x32xf32>
      %110 = arith.cmpf ogt, %3, %109 : vector<2x1x32xf32>
      %111 = arith.xori %108, %110 : vector<2x1x32xi1>
      %cst_69 = arith.constant dense<true> : vector<2x1x32xi1>
      %112 = arith.xori %111, %cst_69 : vector<2x1x32xi1>
      %cst_70 = arith.constant 1.000000e+00 : f32
      %cst_71 = arith.constant 0.000000e+00 : f32
      %113 = vector.broadcast %cst_70 : f32 to vector<2x1x32xf32>
      %114 = vector.broadcast %cst_71 : f32 to vector<2x1x32xf32>
      %115 = arith.select %112, %113, %114 : vector<2x1x32xi1>, vector<2x1x32xf32>
      %116 = vector.shape_cast %115 : vector<2x1x32xf32> to vector<1x2x1x32xf32>
      %cst_72 = arith.constant dense<0.000000e+00> : vector<1xf32>
      %117 = vector.multi_reduction <add>, %116, %cst_72 [1, 2, 3] : vector<1x2x1x32xf32> to vector<1xf32>
      %118 = vector.shape_cast %117 : vector<1xf32> to vector<1x1x1x1xf32>
      %119 = vector.extract %118[0, 0, 0, 0] : f32 from vector<1x1x1x1xf32>
      %120 = vector.broadcast %119 : f32 to vector<1x1x8x128xf32>
      %121 = arith.addf %106, %120 : vector<1x1x8x128xf32>
      %c0_73 = arith.constant 0 : index
      %c0_74 = arith.constant 0 : index
      %c0_75 = arith.constant 0 : index
      %c0_76 = arith.constant 0 : index
      %122 = vector.load %arg10[%c0_73, %c0_74, %c0_75, %c0_76] : memref<1x1x8x128xf32, #tpu.memory_space<vmem>>, vector<1x1x8x128xf32>
      tpu.vector_store %arg10[%c0_73, %c0_74, %c0_75, %c0_76], %121 {strides = array<i32>} : memref<1x1x8x128xf32, #tpu.memory_space<vmem>>, vector<1x1x8x128xf32>,
    } else {
    }
    %c0_18 = arith.constant 0 : index
    %c0_19 = arith.constant 0 : index
    %c0_20 = arith.constant 0 : index
    %c0_21 = arith.constant 0 : index
    %40 = vector.load %arg7[%c0_18, %c0_19, %c0_20, %c0_21] : memref<1x1x8x128xf32, #tpu.memory_space<vmem>>, vector<1x1x8x128xf32>
    %41 = arith.mulf %18, %28 : vector<2x32x32xf32>
    %42 = vector.shape_cast %41 : vector<2x32x32xf32> to vector<1x2x32x32xf32>
    %cst_22 = arith.constant dense<0.000000e+00> : vector<1xf32>
    %43 = vector.multi_reduction <add>, %42, %cst_22 [1, 2, 3] : vector<1x2x32x32xf32> to vector<1xf32>
    %44 = vector.shape_cast %43 : vector<1xf32> to vector<1x1x1x1xf32>
    %45 = vector.extract %44[0, 0, 0, 0] : f32 from vector<1x1x1x1xf32>
    %46 = vector.broadcast %45 : f32 to vector<1x1x8x128xf32>
    %47 = arith.addf %40, %46 : vector<1x1x8x128xf32>
    %c0_23 = arith.constant 0 : index
    %c0_24 = arith.constant 0 : index
    %c0_25 = arith.constant 0 : index
    %c0_26 = arith.constant 0 : index
    %48 = vector.load %arg7[%c0_23, %c0_24, %c0_25, %c0_26] : memref<1x1x8x128xf32, #tpu.memory_space<vmem>>, vector<1x1x8x128xf32>
    tpu.vector_store %arg7[%c0_23, %c0_24, %c0_25, %c0_26], %47 {strides = array<i32>} : memref<1x1x8x128xf32, #tpu.memory_space<vmem>>, vector<1x1x8x128xf32>,
    %c0_27 = arith.constant 0 : index
    %c0_28 = arith.constant 0 : index
    %c0_29 = arith.constant 0 : index
    %c0_30 = arith.constant 0 : index
    %49 = vector.load %arg8[%c0_27, %c0_28, %c0_29, %c0_30] : memref<1x1x8x128xf32, #tpu.memory_space<vmem>>, vector<1x1x8x128xf32>
    %50 = vector.shape_cast %36 : vector<2x32x32xf32> to vector<1x2x32x32xf32>
    %cst_31 = arith.constant dense<0.000000e+00> : vector<1xf32>
    %51 = vector.multi_reduction <add>, %50, %cst_31 [1, 2, 3] : vector<1x2x32x32xf32> to vector<1xf32>
    %52 = vector.shape_cast %51 : vector<1xf32> to vector<1x1x1x1xf32>
    %53 = vector.extract %52[0, 0, 0, 0] : f32 from vector<1x1x1x1xf32>
    %54 = vector.broadcast %53 : f32 to vector<1x1x8x128xf32>
    %55 = arith.addf %49, %54 : vector<1x1x8x128xf32>
    %c0_32 = arith.constant 0 : index
    %c0_33 = arith.constant 0 : index
    %c0_34 = arith.constant 0 : index
    %c0_35 = arith.constant 0 : index
    %56 = vector.load %arg8[%c0_32, %c0_33, %c0_34, %c0_35] : memref<1x1x8x128xf32, #tpu.memory_space<vmem>>, vector<1x1x8x128xf32>
    tpu.vector_store %arg8[%c0_32, %c0_33, %c0_34, %c0_35], %55 {strides = array<i32>} : memref<1x1x8x128xf32, #tpu.memory_space<vmem>>, vector<1x1x8x128xf32>,
    return
  }
  func.func @transform_0(%arg0: i32, %arg1: i32) -> (i32, i32, i32) {
    %c0_i32 = arith.constant 0 : i32
    %c0_i32_0 = arith.constant 0 : i32
    return %arg0, %arg1, %c0_i32 : i32, i32, i32
  }
  func.func @transform_1(%arg0: i32, %arg1: i32) -> (i32, i32, i32) {
    %c0_i32 = arith.constant 0 : i32
    %c0_i32_0 = arith.constant 0 : i32
    return %arg0, %arg1, %c0_i32 : i32, i32, i32
  }
  func.func @transform_2(%arg0: i32, %arg1: i32) -> (i32, i32, i32) {
    %c0_i32 = arith.constant 0 : i32
    %c0_i32_0 = arith.constant 0 : i32
    return %arg0, %arg1, %c0_i32 : i32, i32, i32
  }
  func.func @transform_3(%arg0: i32, %arg1: i32) -> (i32, i32, i32) {
    %c0_i32 = arith.constant 0 : i32
    %c0_i32_0 = arith.constant 0 : i32
    %c0_i32_1 = arith.constant 0 : i32
    return %arg0, %c0_i32, %c0_i32_0 : i32, i32, i32
  }
  func.func @transform_4(%arg0: i32, %arg1: i32) -> (i32, i32, i32) {
    %c0_i32 = arith.constant 0 : i32
    %c0_i32_0 = arith.constant 0 : i32
    %c0_i32_1 = arith.constant 0 : i32
    return %arg0, %c0_i32, %c0_i32_0 : i32, i32, i32
  }
  func.func @transform_5(%arg0: i32, %arg1: i32) -> (i32, i32, i32, i32) {
    %c0_i32 = arith.constant 0 : i32
    %c0_i32_0 = arith.constant 0 : i32
    %c0_i32_1 = arith.constant 0 : i32
    %c0_i32_2 = arith.constant 0 : i32
    return %arg0, %c0_i32, %c0_i32_0, %c0_i32_1 : i32, i32, i32, i32
  }
  func.func @transform_6(%arg0: i32, %arg1: i32) -> (i32, i32, i32, i32) {
    %c0_i32 = arith.constant 0 : i32
    %c0_i32_0 = arith.constant 0 : i32
    %c0_i32_1 = arith.constant 0 : i32
    %c0_i32_2 = arith.constant 0 : i32
    return %arg0, %c0_i32, %c0_i32_0, %c0_i32_1 : i32, i32, i32, i32
  }
  func.func @transform_7(%arg0: i32, %arg1: i32) -> (i32, i32, i32, i32) {
    %c0_i32 = arith.constant 0 : i32
    %c0_i32_0 = arith.constant 0 : i32
    %c0_i32_1 = arith.constant 0 : i32
    %c0_i32_2 = arith.constant 0 : i32
    return %arg0, %c0_i32, %c0_i32_0, %c0_i32_1 : i32, i32, i32, i32
  }
  func.func @transform_8(%arg0: i32, %arg1: i32) -> (i32, i32, i32, i32) {
    %c0_i32 = arith.constant 0 : i32
    %c0_i32_0 = arith.constant 0 : i32
    %c0_i32_1 = arith.constant 0 : i32
    %c0_i32_2 = arith.constant 0 : i32
    return %arg0, %c0_i32, %c0_i32_0, %c0_i32_1 : i32, i32, i32, i32
  }
}

</mosaic_0001>

<llo_original>
// kernel: tpu_custom_call.1
$region0: #{tpu_custom_call.1}
  #allocation0 [shape = 'u32[]', space=smem, size = 0x4, offset = 0x4, fixed_abs, tag = 'smem constant byte address 0x4 - core index']
  #allocation1 [shape = 'u32[72,128]{1,0:T(1,128)}', space=vmem, size = 0x9000, scoped, tag = 'internal scratch']
  %s0 = inlined_call_operand.vmem [shape: f32[2,32,32], index: 0, kind: input, shape index: {}]
  %s1 = inlined_call_operand.hbm [shape: f32[2,32,32], index: 1, kind: input, shape index: {}]
  %s2 = inlined_call_operand.vmem [shape: f32[2,32,1], index: 2, kind: input, shape index: {}]
  %s3 = inlined_call_operand.vmem [shape: f32[2,1,32], index: 3, kind: input, shape index: {}]
  %s4 = inlined_call_operand.vmem [shape: f32[2,1,32], index: 4, kind: input, shape index: {}]
  %s5 = inlined_call_operand.hbm [shape: f32[1,1,8,128], index: 5, kind: output, shape index: {0}]
  %s6 = inlined_call_operand.hbm [shape: f32[1,1,8,128], index: 6, kind: output, shape index: {1}]
  %s7 = inlined_call_operand.hbm [shape: f32[1,1,8,128], index: 7, kind: output, shape index: {2}]
  %s8 = inlined_call_operand.hbm [shape: f32[1,1,8,128], index: 8, kind: output, shape index: {3}]
  %9 = xla_tuple %s5, %s6, %s7, %s8
  %s10 = sld [smem:[#allocation0]]
  $region62: #{tpu_custom_call.1} parent=0
    _
  %s12 = ssub.s32 1, %s10
  %s13 = scalar_select 0, %s12, %s10
  $region1: #{tpu_custom_call.1} parent=0
    #allocation2 [shape = 'u8[32768]{0}', space=vmem, size = 0x8000, scoped, tag = 'input window, operand 1, single buffered']
    #allocation3 [shape = 's32[1]{0}', space=sflag, size = 0x4, scoped, tag = 'scoped memory for tpu_custom_call.1']
    #allocation4 [shape = 's32[1]{0}', space=sflag, size = 0x4, scoped, tag = 'scoped memory for tpu_custom_call.1']
    #allocation5 [shape = 'u8[4096]{0}', space=vmem, size = 0x1000, scoped, tag = 'output window, operand 0, single buffered']
    #allocation6 [shape = 'u8[4096]{0}', space=vmem, size = 0x1000, scoped, tag = 'output window, operand 1, single buffered']
    #allocation7 [shape = 's32[1]{0}', space=sflag, size = 0x4, scoped, tag = 'scoped memory for tpu_custom_call.1']
    #allocation8 [shape = 'u8[4096]{0}', space=vmem, size = 0x1000, scoped, tag = 'output window, operand 2, single buffered']
    #allocation9 [shape = 'u8[4096]{0}', space=vmem, size = 0x1000, scoped, tag = 'output window, operand 3, single buffered']
    #allocation10 [shape = 's32[1]{0}', space=sflag, size = 0x4, scoped, tag = 'scoped memory for tpu_custom_call.1']
    %14 = vsyncpa [#allocation3], 0
    %15 = vsyncpa [#allocation4], 0
    %16 = vsyncpa [#allocation7], 0
    %17 = vsyncpa [#allocation10], 0
    // Predicated region
    $region2: #{tpu_custom_call.1} parent=1 // pred_check
      _
    $region3: #{tpu_custom_call.1} parent=1 // pred_check_branch
      %19 = sbr.rel (0) target = $region5
    $region4: #{tpu_custom_call.1} parent=1 // pred_region
      _
    $region5: #{tpu_custom_call.1} parent=1 // pred_fallthru
      _
    // Predicated region
    $region6: #{tpu_custom_call.1} parent=1 // pred_check
      _
    $region7: #{tpu_custom_call.1} parent=1 // pred_check_branch
      %21 = sbr.rel (0) target = $region9
    $region8: #{tpu_custom_call.1} parent=1 // pred_region
      %23 = vsyncadd [#allocation3], 0
      %s24 = sshll.u32 %s1, 4
      %s25 = int_to_ptr.hbm [resolvable:$true] %s24
      %s26 = sshll.u32 [#allocation2], 4
      %s27 = int_to_ptr.vmem [resolvable:$true] %s26
      %32 = dma.hbm_to_vmem [thread:$0]  %s25, 1024, %s27, [#allocation3], 128, 128, 8
    $region9: #{tpu_custom_call.1} parent=1 // pred_fallthru
      _
    // Predicated region
    $region10: #{tpu_custom_call.1} parent=1 // pred_check
      _
    $region11: #{tpu_custom_call.1} parent=1 // pred_check_branch
      %34 = sbr.rel (0) target = $region13
    $region12: #{tpu_custom_call.1} parent=1 // pred_region
      _
    $region13: #{tpu_custom_call.1} parent=1 // pred_fallthru
      _
    // Predicated region
    $region14: #{tpu_custom_call.1} parent=1 // pred_check
      _
    $region15: #{tpu_custom_call.1} parent=1 // pred_check_branch
      %36 = sbr.rel (0) target = $region17
    $region16: #{tpu_custom_call.1} parent=1 // pred_region
      _
    $region17: #{tpu_custom_call.1} parent=1 // pred_fallthru
      _
    // Predicated region
    $region18: #{tpu_custom_call.1} parent=1 // pred_check
      _
    $region19: #{tpu_custom_call.1} parent=1 // pred_check_branch
      %38 = sbr.rel (0) target = $region21
    $region20: #{tpu_custom_call.1} parent=1 // pred_region
      _
    $region21: #{tpu_custom_call.1} parent=1 // pred_fallthru
      _
    // Predicated region
    $region22: #{tpu_custom_call.1} parent=1 // pred_check
      _
    $region23: #{tpu_custom_call.1} parent=1 // pred_check_branch
      %40 = sbr.rel (0) target = $region25
    $region24: #{tpu_custom_call.1} parent=1 // pred_region
      %42 = dma.done [#allocation3], 1024
    $region25: #{tpu_custom_call.1} parent=1 // pred_fallthru
      _
    %v43 = vld [vmem:[%s0] sm:$0xff]
    %v44 = vld [vmem:[%s0 + $0x8] sm:$0xff]
    %v45 = vld [vmem:[%s0 + $0x10] sm:$0xff]
    %v46 = vld [vmem:[%s0 + $0x18] sm:$0xff]
    %v47 = vld [vmem:[%s0 + $0x20] sm:$0xff]
    %v48 = vld [vmem:[%s0 + $0x28] sm:$0xff]
    %v49 = vld [vmem:[%s0 + $0x30] sm:$0xff]
    %v50 = vld [vmem:[%s0 + $0x38] sm:$0xff]
    %v51 = vld [vmem:[#allocation2] sm:$0xff]
    %v52 = vld [vmem:[#allocation2 + $0x8] sm:$0xff]
    %v53 = vld [vmem:[#allocation2 + $0x10] sm:$0xff]
    %v54 = vld [vmem:[#allocation2 + $0x18] sm:$0xff]
    %v55 = vld [vmem:[#allocation2 + $0x20] sm:$0xff]
    %v56 = vld [vmem:[#allocation2 + $0x28] sm:$0xff]
    %v57 = vld [vmem:[#allocation2 + $0x30] sm:$0xff]
    %v58 = vld [vmem:[#allocation2 + $0x38] sm:$0xff]
    %v59 = vld [vmem:[%s2] sm:$0xff]
    %v60 = vld [vmem:[%s2 + $0x8] sm:$0xff]
    %v61 = vld [vmem:[%s2 + $0x10] sm:$0xff]
    %v62 = vld [vmem:[%s2 + $0x18] sm:$0xff]
    %v63 = vld [vmem:[%s2 + $0x20] sm:$0xff]
    %v64 = vld [vmem:[%s2 + $0x28] sm:$0xff]
    %v65 = vld [vmem:[%s2 + $0x30] sm:$0xff]
    %v66 = vld [vmem:[%s2 + $0x38] sm:$0xff]
    %v67 = vld [vmem:[%s3] sm:$0x1]
    %v68 = vld [vmem:[%s3 + $0x1] sm:$0x1]
    %s69 = smul.u32 0, 32
    %v70 = vlaneseq
    %v71 = vshrl.u32 %v70, 7
    %v72 = vadd.s32 %v71, 8
    %v73 = vadd.s32 %v71, 16
    %v74 = vadd.s32 %v71, 24
    %v75 = vstv %s69
    %v76 = vadd.s32 %v75, %v71
    %v77 = vadd.s32 %v75, %v72
    %v78 = vadd.s32 %v75, %v73
    %v79 = vadd.s32 %v75, %v74
    %v80 = vlaneseq
    %v81 = vand.u32 %v80, 127
    %vm82 = vcmp.eq.s32.totalorder %v76, %v81
    %vm83 = vcmp.eq.s32.totalorder %v77, %v81
    %vm84 = vcmp.eq.s32.totalorder %v78, %v81
    %vm85 = vcmp.eq.s32.totalorder %v79, %v81
    %87 = vset.pattern.permute.xlu0 0
    %88 = vperm.xlu0 %87, %v59
    %v89 = vpop.permute.xlu0 %88
    %92 = vset.pattern.permute.xlu0 0
    %93 = vperm.xlu0 %92, %v60
    %v94 = vpop.permute.xlu0 %93
    %97 = vset.pattern.permute.xlu0 0
    %98 = vperm.xlu0 %97, %v61
    %v99 = vpop.permute.xlu0 %98
    %102 = vset.pattern.permute.xlu0 0
    %103 = vperm.xlu0 %102, %v62
    %v104 = vpop.permute.xlu0 %103
    %107 = vset.pattern.permute.xlu0 0
    %108 = vperm.xlu0 %107, %v63
    %v109 = vpop.permute.xlu0 %108
    %112 = vset.pattern.permute.xlu0 0
    %113 = vperm.xlu0 %112, %v64
    %v114 = vpop.permute.xlu0 %113
    %117 = vset.pattern.permute.xlu0 0
    %118 = vperm.xlu0 %117, %v65
    %v119 = vpop.permute.xlu0 %118
    %122 = vset.pattern.permute.xlu0 0
    %123 = vperm.xlu0 %122, %v66
    %v124 = vpop.permute.xlu0 %123
    %v128 = vperm.slane %v67, 0
    %v129 = vperm.slane %v68, 0
    %v132 = vmul.f32 %v89, %v128
    %v133 = vmul.f32 %v94, %v128
    %v134 = vmul.f32 %v99, %v128
    %v135 = vmul.f32 %v104, %v128
    %v136 = vmul.f32 %v109, %v129
    %v137 = vmul.f32 %v114, %v129
    %v138 = vmul.f32 %v119, %v129
    %v139 = vmul.f32 %v124, %v129
    %v140 = vsel %vm82, 1, 0
    %v141 = vsel %vm83, 1, 0
    %v142 = vsel %vm84, 1, 0
    %v143 = vsel %vm85, 1, 0
    %vm144 = vcmp.eq.s32.totalorder %v140, 1
    %vm145 = vcmp.eq.s32.totalorder %v141, 1
    %vm146 = vcmp.eq.s32.totalorder %v142, 1
    %vm147 = vcmp.eq.s32.totalorder %v143, 1
    %v148 = vsel %vm144, 0.0, %v132
    %v149 = vsel %vm145, 0.0, %v133
    %v150 = vsel %vm146, 0.0, %v134
    %v151 = vsel %vm147, 0.0, %v135
    %v152 = vsel %vm144, 0.0, %v136
    %v153 = vsel %vm145, 0.0, %v137
    %v154 = vsel %vm146, 0.0, %v138
    %v155 = vsel %vm147, 0.0, %v139
    %v156 = vmax.f32 %v43, 0.0
    %v157 = vmax.f32 %v44, 0.0
    %v158 = vmax.f32 %v45, 0.0
    %v159 = vmax.f32 %v46, 0.0
    %v160 = vmax.f32 %v47, 0.0
    %v161 = vmax.f32 %v48, 0.0
    %v162 = vmax.f32 %v49, 0.0
    %v163 = vmax.f32 %v50, 0.0
    %v164 = vmul.f32 %v43, %v51
    %v165 = vmul.f32 %v44, %v52
    %v166 = vmul.f32 %v45, %v53
    %v167 = vmul.f32 %v46, %v54
    %v168 = vmul.f32 %v47, %v55
    %v169 = vmul.f32 %v48, %v56
    %v170 = vmul.f32 %v49, %v57
    %v171 = vmul.f32 %v50, %v58
    %v172 = vsub.f32 %v156, %v164
    %v173 = vsub.f32 %v157, %v165
    %v174 = vsub.f32 %v158, %v166
    %v175 = vsub.f32 %v159, %v167
    %v176 = vsub.f32 %v160, %v168
    %v177 = vsub.f32 %v161, %v169
    %v178 = vsub.f32 %v162, %v170
    %v179 = vsub.f32 %v163, %v171
    %v180 = vand.u32 2147483647, %v43
    %v181 = vand.u32 2147483647, %v44
    %v182 = vand.u32 2147483647, %v45
    %v183 = vand.u32 2147483647, %v46
    %v184 = vand.u32 2147483647, %v47
    %v185 = vand.u32 2147483647, %v48
    %v186 = vand.u32 2147483647, %v49
    %v187 = vand.u32 2147483647, %v50
    %v188 = vsub.f32 0.0, %v180
    %v189 = vsub.f32 0.0, %v181
    %v190 = vsub.f32 0.0, %v182
    %v191 = vsub.f32 0.0, %v183
    %v192 = vsub.f32 0.0, %v184
    %v193 = vsub.f32 0.0, %v185
    %v194 = vsub.f32 0.0, %v186
    %v195 = vsub.f32 0.0, %v187
    %v196 = vmul.f32 %v188, 1.442695
    %v197 = vpow.pop %v196
    %v198 = vmul.f32 %v189, 1.442695
    %v199 = vpow.pop %v198
    %v200 = vmul.f32 %v190, 1.442695
    %v201 = vpow.pop %v200
    %v202 = vmul.f32 %v191, 1.442695
    %v203 = vpow.pop %v202
    %v204 = vmul.f32 %v192, 1.442695
    %v205 = vpow.pop %v204
    %v206 = vmul.f32 %v193, 1.442695
    %v207 = vpow.pop %v206
    %v208 = vmul.f32 %v194, 1.442695
    %v209 = vpow.pop %v208
    %v210 = vmul.f32 %v195, 1.442695
    %v211 = vpow.pop %v210
    %v212 = vadd.f32 %v197, 1.0
    %v213 = vlog2.pop %v212
    %v214 = vmul.f32 %v213, 0.6931472
    %v215 = vmul.f32 -0.5, %v197
    %v216 = vadd.f32 %v215, 1.0
    %v217 = vmul.f32 %v216, %v197
    %v218 = vand.u32 2147483647, %v197
    %vm219 = vcmp.lt.f32.partialorder %v218, 0.0004427343
    %v220 = vsel %vm219, %v217, %v214
    %v221 = vadd.f32 %v199, 1.0
    %v222 = vlog2.pop %v221
    %v223 = vmul.f32 %v222, 0.6931472
    %v224 = vmul.f32 -0.5, %v199
    %v225 = vadd.f32 %v224, 1.0
    %v226 = vmul.f32 %v225, %v199
    %v227 = vand.u32 2147483647, %v199
    %vm228 = vcmp.lt.f32.partialorder %v227, 0.0004427343
    %v229 = vsel %vm228, %v226, %v223
    %v230 = vadd.f32 %v201, 1.0
    %v231 = vlog2.pop %v230
    %v232 = vmul.f32 %v231, 0.6931472
    %v233 = vmul.f32 -0.5, %v201
    %v234 = vadd.f32 %v233, 1.0
    %v235 = vmul.f32 %v234, %v201
    %v236 = vand.u32 2147483647, %v201
    %vm237 = vcmp.lt.f32.partialorder %v236, 0.0004427343
    %v238 = vsel %vm237, %v235, %v232
    %v239 = vadd.f32 %v203, 1.0
    %v240 = vlog2.pop %v239
    %v241 = vmul.f32 %v240, 0.6931472
    %v242 = vmul.f32 -0.5, %v203
    %v243 = vadd.f32 %v242, 1.0
    %v244 = vmul.f32 %v243, %v203
    %v245 = vand.u32 2147483647, %v203
    %vm246 = vcmp.lt.f32.partialorder %v245, 0.0004427343
    %v247 = vsel %vm246, %v244, %v241
    %v248 = vadd.f32 %v205, 1.0
    %v249 = vlog2.pop %v248
    %v250 = vmul.f32 %v249, 0.6931472
    %v251 = vmul.f32 -0.5, %v205
    %v252 = vadd.f32 %v251, 1.0
    %v253 = vmul.f32 %v252, %v205
    %v254 = vand.u32 2147483647, %v205
    %vm255 = vcmp.lt.f32.partialorder %v254, 0.0004427343
    %v256 = vsel %vm255, %v253, %v250
    %v257 = vadd.f32 %v207, 1.0
    %v258 = vlog2.pop %v257
    %v259 = vmul.f32 %v258, 0.6931472
    %v260 = vmul.f32 -0.5, %v207
    %v261 = vadd.f32 %v260, 1.0
    %v262 = vmul.f32 %v261, %v207
    %v263 = vand.u32 2147483647, %v207
    %vm264 = vcmp.lt.f32.partialorder %v263, 0.0004427343
    %v265 = vsel %vm264, %v262, %v259
    %v266 = vadd.f32 %v209, 1.0
    %v267 = vlog2.pop %v266
    %v268 = vmul.f32 %v267, 0.6931472
    %v269 = vmul.f32 -0.5, %v209
    %v270 = vadd.f32 %v269, 1.0
    %v271 = vmul.f32 %v270, %v209
    %v272 = vand.u32 2147483647, %v209
    %vm273 = vcmp.lt.f32.partialorder %v272, 0.0004427343
    %v274 = vsel %vm273, %v271, %v268
    %v275 = vadd.f32 %v211, 1.0
    %v276 = vlog2.pop %v275
    %v277 = vmul.f32 %v276, 0.6931472
    %v278 = vmul.f32 -0.5, %v211
    %v279 = vadd.f32 %v278, 1.0
    %v280 = vmul.f32 %v279, %v211
    %v281 = vand.u32 2147483647, %v211
    %vm282 = vcmp.lt.f32.partialorder %v281, 0.0004427343
    %v283 = vsel %vm282, %v280, %v277
    %v284 = vadd.f32 %v172, %v220
    %v285 = vadd.f32 %v173, %v229
    %v286 = vadd.f32 %v174, %v238
    %v287 = vadd.f32 %v175, %v247
    %v288 = vadd.f32 %v176, %v256
    %v289 = vadd.f32 %v177, %v265
    %v290 = vadd.f32 %v178, %v274
    %v291 = vadd.f32 %v179, %v283
    %vm292 = vcmp.gt.f32.partialorder %v43, 0.0
    %vm293 = vcmp.gt.f32.partialorder %v44, 0.0
    %vm294 = vcmp.gt.f32.partialorder %v45, 0.0
    %vm295 = vcmp.gt.f32.partialorder %v46, 0.0
    %vm296 = vcmp.gt.f32.partialorder %v47, 0.0
    %vm297 = vcmp.gt.f32.partialorder %v48, 0.0
    %vm298 = vcmp.gt.f32.partialorder %v49, 0.0
    %vm299 = vcmp.gt.f32.partialorder %v50, 0.0
    %vm300 = vcmp.gt.f32.partialorder %v51, 0.5
    %vm301 = vcmp.gt.f32.partialorder %v52, 0.5
    %vm302 = vcmp.gt.f32.partialorder %v53, 0.5
    %vm303 = vcmp.gt.f32.partialorder %v54, 0.5
    %vm304 = vcmp.gt.f32.partialorder %v55, 0.5
    %vm305 = vcmp.gt.f32.partialorder %v56, 0.5
    %vm306 = vcmp.gt.f32.partialorder %v57, 0.5
    %vm307 = vcmp.gt.f32.partialorder %v58, 0.5
    %vm308 = vmxor %vm292, %vm300
    %vm309 = vmxor %vm293, %vm301
    %vm310 = vmxor %vm294, %vm302
    %vm311 = vmxor %vm295, %vm303
    %vm312 = vmxor %vm296, %vm304
    %vm313 = vmxor %vm297, %vm305
    %vm314 = vmxor %vm298, %vm306
    %vm315 = vmxor %vm299, %vm307
    %vm316 = vmxor %vm308, 1
    %vm317 = vmxor %vm309, 1
    %vm318 = vmxor %vm310, 1
    %vm319 = vmxor %vm311, 1
    %vm320 = vmxor %vm312, 1
    %vm321 = vmxor %vm313, 1
    %vm322 = vmxor %vm314, 1
    %vm323 = vmxor %vm315, 1
    %v324 = vsel %vm316, %v148, 0.0
    %v325 = vsel %vm317, %v149, 0.0
    %v326 = vsel %vm318, %v150, 0.0
    %v327 = vsel %vm319, %v151, 0.0
    %v328 = vsel %vm320, %v152, 0.0
    %v329 = vsel %vm321, %v153, 0.0
    %v330 = vsel %vm322, %v154, 0.0
    %v331 = vsel %vm323, %v155, 0.0
    %p332 = scmp.eq.s32.totalorder 0, 0
    // Predicated region
    $region26: #{tpu_custom_call.1} parent=1 // pred_check
      %p333 = pneg %p332
    $region27: #{tpu_custom_call.1} parent=1 // pred_check_branch
      %335 = sbr.rel (%p333) target = $region29
    $region28: #{tpu_custom_call.1} parent=1 // pred_region
      %336 = vst [vmem:[#allocation5] sm:$0xff] 0.0
      %337 = vst [vmem:[#allocation6] sm:$0xff] 0.0
      %v338 = vld [vmem:[%s4] sm:$0x1]
      %v339 = vld [vmem:[%s4 + $0x1] sm:$0x1]
      %v340 = vand.u32 2147483647, %v338
      %v341 = vand.u32 2147483647, %v339
      %v342 = vsub.f32 0.0, %v340
      %v343 = vsub.f32 0.0, %v341
      %v344 = vmul.f32 %v342, 1.442695
      %v345 = vpow.pop %v344
      %v346 = vmul.f32 %v343, 1.442695
      %v347 = vpow.pop %v346
      %v348 = vmax.f32 %v338, 0.0
      %v349 = vmax.f32 %v339, 0.0
      %v350 = vmul.f32 %v338, %v67
      %v351 = vmul.f32 %v339, %v68
      %v352 = vsub.f32 %v348, %v350
      %v353 = vsub.f32 %v349, %v351
      %v354 = vadd.f32 %v345, 1.0
      %v355 = vlog2.pop %v354
      %v356 = vmul.f32 %v355, 0.6931472
      %v357 = vmul.f32 -0.5, %v345
      %v358 = vadd.f32 %v357, 1.0
      %v359 = vmul.f32 %v358, %v345
      %v360 = vand.u32 2147483647, %v345
      %vm361 = vcmp.lt.f32.partialorder %v360, 0.0004427343
      %v362 = vsel %vm361, %v359, %v356
      %v363 = vadd.f32 %v347, 1.0
      %v364 = vlog2.pop %v363
      %v365 = vmul.f32 %v364, 0.6931472
      %v366 = vmul.f32 -0.5, %v347
      %v367 = vadd.f32 %v366, 1.0
      %v368 = vmul.f32 %v367, %v347
      %v369 = vand.u32 2147483647, %v347
      %vm370 = vcmp.lt.f32.partialorder %v369, 0.0004427343
      %v371 = vsel %vm370, %v368, %v365
      %v372 = vadd.f32 %v352, %v362
      %v373 = vadd.f32 %v353, %v371
      %vm374 = vcmp.ge.f32.partialorder %v338, 0.0
      %vm375 = vcmp.ge.f32.partialorder %v339, 0.0
      %v376 = vsel %vm374, 1.0, %v345
      %v377 = vsel %vm375, 1.0, %v347
      %v378 = vadd.f32 %v345, 1.0
      %v379 = vadd.f32 %v347, 1.0
      %v380 = vrcp.pop %v378
      %v381 = vmul.f32 %v378, %v380
      %v382 = vsub.f32 1.0, %v381
      %v383 = vmul.f32 %v380, %v382
      %v384 = vadd.f32 %v380, %v383
      %vm385 = vweird.f32 %v378
      %vm386 = vweird.f32 %v380
      %vm387 = vmor %vm385, %vm386
      %v388 = vsel %vm387, %v380, %v384
      %v389 = vand.u32 2147483647, %v378
      %vm390 = vcmp.eq.f32.partialorder %v389, 8.507059e+37
      %v391 = vand.u32 %v378, 2147483648
      %v392 = vor.u32 1.1754944e-38, %v391
      %v393 = vsel %vm390, %v392, %v388
      %v394 = vmul.f32 %v376, %v393
      %v395 = vrcp.pop %v379
      %v396 = vmul.f32 %v379, %v395
      %v397 = vsub.f32 1.0, %v396
      %v398 = vmul.f32 %v395, %v397
      %v399 = vadd.f32 %v395, %v398
      %vm400 = vweird.f32 %v379
      %vm401 = vweird.f32 %v395
      %vm402 = vmor %vm400, %vm401
      %v403 = vsel %vm402, %v395, %v399
      %v404 = vand.u32 2147483647, %v379
      %vm405 = vcmp.eq.f32.partialorder %v404, 8.507059e+37
      %v406 = vand.u32 %v379, 2147483648
      %v407 = vor.u32 1.1754944e-38, %v406
      %v408 = vsel %vm405, %v407, %v403
      %v409 = vmul.f32 %v377, %v408
      %v410 = vmul.f32 %v394, %v67
      %v411 = vmul.f32 %v409, %v68
      %v412 = vsub.f32 1.0, %v394
      %v413 = vsub.f32 1.0, %v409
      %v414 = vsub.f32 1.0, %v67
      %v415 = vsub.f32 1.0, %v68
      %v416 = vmul.f32 %v412, %v414
      %v417 = vmul.f32 %v413, %v415
      %v418 = vadd.f32 %v410, %v416
      %v419 = vadd.f32 %v411, %v417
      %v420 = vmul.f32 %v67, 0.25
      %v421 = vmul.f32 %v68, 0.25
      %v422 = vmul.f32 %v414, 0.75
      %v423 = vmul.f32 %v415, 0.75
      %v424 = vadd.f32 %v420, %v422
      %v425 = vadd.f32 %v421, %v423
      %v426 = vmul.f32 %v424, %v372
      %v427 = vmul.f32 %v425, %v373
      %v428 = vsub.f32 1.0, %v418
      %v429 = vsub.f32 1.0, %v419
      %v430 = vmul.f32 %v428, %v428
      %v431 = vmul.f32 %v429, %v429
      %v432 = vmul.f32 %v426, %v430
      %v433 = vmul.f32 %v427, %v431
      %vm434 = vcmask 253952
      %v435 = vsel %vm434, %v432, 0.0
      %v436 = vsel %vm434, %v433, 0.0
      %v437 = vadd.f32 %v435, %v436
      %438 = vadd.xlane.f32.xlu0 %v437
      %v439 = vpop.xlane.xlu0 %438
      %v440 = vrot.slane %v439, 4
      %v441 = vadd.f32 %v439, %v440
      %v442 = vrot.slane %v441, 2
      %v443 = vadd.f32 %v441, %v442
      %v444 = vrot.slane %v443, 1
      %v445 = vadd.f32 %v443, %v444
      %s446 = vtos %v445
      %v447 = vstv %s446
      %v448 = vadd.f32 %v447, 0.0
      %449 = vst [vmem:[#allocation8] sm:$0xff] %v448
      %vm450 = vcmp.gt.f32.partialorder %v338, 0.0
      %vm451 = vcmp.gt.f32.partialorder %v339, 0.0
      %vm452 = vcmp.gt.f32.partialorder %v67, 0.5
      %vm453 = vcmp.gt.f32.partialorder %v68, 0.5
      %vm454 = vmxor %vm450, %vm452
      %vm455 = vmxor %vm451, %vm453
      %vm456 = vmxor %vm454, 1
      %vm457 = vmxor %vm455, 1
      %v458 = vsel %vm456, 1.0, 0.0
      %v459 = vsel %vm457, 1.0, 0.0
      %v460 = vsel %vm434, %v458, 0.0
      %v461 = vsel %vm434, %v459, 0.0
      %v462 = vadd.f32 %v460, %v461
      %463 = vadd.xlane.f32.xlu0 %v462
      %v464 = vpop.xlane.xlu0 %463
      %v465 = vrot.slane %v464, 4
      %v466 = vadd.f32 %v464, %v465
      %v467 = vrot.slane %v466, 2
      %v468 = vadd.f32 %v466, %v467
      %v469 = vrot.slane %v468, 1
      %v470 = vadd.f32 %v468, %v469
      %s471 = vtos %v470
      %v472 = vstv %s471
      %v473 = vadd.f32 %v472, 0.0
      %474 = vst [vmem:[#allocation9] sm:$0xff] %v473
    $region29: #{tpu_custom_call.1} parent=1 // pred_fallthru
      _
    %v475 = vld [vmem:[#allocation5] sm:$0xff]
    %v476 = vmul.f32 %v148, %v284
    %v477 = vmul.f32 %v149, %v285
    %v478 = vmul.f32 %v150, %v286
    %v479 = vmul.f32 %v151, %v287
    %v480 = vmul.f32 %v152, %v288
    %v481 = vmul.f32 %v153, %v289
    %v482 = vmul.f32 %v154, %v290
    %v483 = vmul.f32 %v155, %v291
    %vm484 = vcmask 261120
    %v485 = vsel %vm484, %v476, 0.0
    %v486 = vsel %vm484, %v477, 0.0
    %v487 = vadd.f32 %v485, %v486
    %v488 = vsel %vm484, %v478, 0.0
    %v489 = vadd.f32 %v487, %v488
    %v490 = vsel %vm484, %v479, 0.0
    %v491 = vadd.f32 %v489, %v490
    %v492 = vsel %vm484, %v480, 0.0
    %v493 = vadd.f32 %v491, %v492
    %v494 = vsel %vm484, %v481, 0.0
    %v495 = vadd.f32 %v493, %v494
    %v496 = vsel %vm484, %v482, 0.0
    %v497 = vadd.f32 %v495, %v496
    %v498 = vsel %vm484, %v483, 0.0
    %v499 = vadd.f32 %v497, %v498
    %500 = vadd.xlane.f32.xlu0 %v499
    %v501 = vpop.xlane.xlu0 %500
    %v502 = vrot.slane %v501, 4
    %v503 = vadd.f32 %v501, %v502
    %v504 = vrot.slane %v503, 2
    %v505 = vadd.f32 %v503, %v504
    %v506 = vrot.slane %v505, 1
    %v507 = vadd.f32 %v505, %v506
    %s508 = vtos %v507
    %v509 = vstv %s508
    %v510 = vadd.f32 %v475, %v509
    %511 = vst [vmem:[#allocation5] sm:$0xff] %v510
    %v512 = vld [vmem:[#allocation6] sm:$0xff]
    %v513 = vsel %vm484, %v324, 0.0
    %v514 = vsel %vm484, %v325, 0.0
    %v515 = vadd.f32 %v513, %v514
    %v516 = vsel %vm484, %v326, 0.0
    %v517 = vadd.f32 %v515, %v516
    %v518 = vsel %vm484, %v327, 0.0
    %v519 = vadd.f32 %v517, %v518
    %v520 = vsel %vm484, %v328, 0.0
    %v521 = vadd.f32 %v519, %v520
    %v522 = vsel %vm484, %v329, 0.0
    %v523 = vadd.f32 %v521, %v522
    %v524 = vsel %vm484, %v330, 0.0
    %v525 = vadd.f32 %v523, %v524
    %v526 = vsel %vm484, %v331, 0.0
    %v527 = vadd.f32 %v525, %v526
    %528 = vadd.xlane.f32.xlu0 %v527
    %v529 = vpop.xlane.xlu0 %528
    %v530 = vrot.slane %v529, 4
    %v531 = vadd.f32 %v529, %v530
    %v532 = vrot.slane %v531, 2
    %v533 = vadd.f32 %v531, %v532
    %v534 = vrot.slane %v533, 1
    %v535 = vadd.f32 %v533, %v534
    %s536 = vtos %v535
    %v537 = vstv %s536
    %v538 = vadd.f32 %v512, %v537
    %539 = vst [vmem:[#allocation6] sm:$0xff] %v538
    // Predicated region
    $region30: #{tpu_custom_call.1} parent=1 // pred_check
      _
    $region31: #{tpu_custom_call.1} parent=1 // pred_check_branch
      %541 = sbr.rel (0) target = $region33
    $region32: #{tpu_custom_call.1} parent=1 // pred_region
      %543 = vsyncadd [#allocation4], 0
      %s545 = sshll.u32 [#allocation5], 4
      %s546 = int_to_ptr.vmem [resolvable:$true] %s545
      %s547 = sshll.u32 %s5, 4
      %s548 = int_to_ptr.hbm [resolvable:$true] %s547
      %550 = dma.vmem_to_hbm [thread:$0]  %s546, 128, %s548, [#allocation4]
    $region33: #{tpu_custom_call.1} parent=1 // pred_fallthru
      _
    // Predicated region
    $region34: #{tpu_custom_call.1} parent=1 // pred_check
      _
    $region35: #{tpu_custom_call.1} parent=1 // pred_check_branch
      %552 = sbr.rel (0) target = $region37
    $region36: #{tpu_custom_call.1} parent=1 // pred_region
      %554 = vsyncadd [#allocation7], 0
      %s556 = sshll.u32 [#allocation6], 4
      %s557 = int_to_ptr.vmem [resolvable:$true] %s556
      %s558 = sshll.u32 %s6, 4
      %s559 = int_to_ptr.hbm [resolvable:$true] %s558
      %561 = dma.vmem_to_hbm [thread:$0]  %s557, 128, %s559, [#allocation7]
    $region37: #{tpu_custom_call.1} parent=1 // pred_fallthru
      _
    // Predicated region
    $region38: #{tpu_custom_call.1} parent=1 // pred_check
      _
    $region39: #{tpu_custom_call.1} parent=1 // pred_check_branch
      %563 = sbr.rel (0) target = $region41
    $region40: #{tpu_custom_call.1} parent=1 // pred_region
      %565 = vsyncadd [#allocation7], 0
      %s567 = sshll.u32 [#allocation8], 4
      %s568 = int_to_ptr.vmem [resolvable:$true] %s567
      %s569 = sshll.u32 %s7, 4
      %s570 = int_to_ptr.hbm [resolvable:$true] %s569
      %572 = dma.vmem_to_hbm [thread:$0]  %s568, 128, %s570, [#allocation7]
    $region41: #{tpu_custom_call.1} parent=1 // pred_fallthru
      _
    // Predicated region
    $region42: #{tpu_custom_call.1} parent=1 // pred_check
      _
    $region43: #{tpu_custom_call.1} parent=1 // pred_check_branch
      %574 = sbr.rel (0) target = $region45
    $region44: #{tpu_custom_call.1} parent=1 // pred_region
      %576 = vsyncadd [#allocation10], 0
      %s578 = sshll.u32 [#allocation9], 4
      %s579 = int_to_ptr.vmem [resolvable:$true] %s578
      %s580 = sshll.u32 %s8, 4
      %s581 = int_to_ptr.hbm [resolvable:$true] %s580
      %583 = dma.vmem_to_hbm [thread:$0]  %s579, 128, %s581, [#allocation10]
    $region45: #{tpu_custom_call.1} parent=1 // pred_fallthru
      _
    // Predicated region
    $region46: #{tpu_custom_call.1} parent=1 // pred_check
      _
    $region47: #{tpu_custom_call.1} parent=1 // pred_check_branch
      %585 = sbr.rel (0) target = $region49
    $region48: #{tpu_custom_call.1} parent=1 // pred_region
      %587 = dma.done [#allocation4], 128
    $region49: #{tpu_custom_call.1} parent=1 // pred_fallthru
      _
    // Predicated region
    $region50: #{tpu_custom_call.1} parent=1 // pred_check
      _
    $region51: #{tpu_custom_call.1} parent=1 // pred_check_branch
      %589 = sbr.rel (0) target = $region53
    $region52: #{tpu_custom_call.1} parent=1 // pred_region
      %591 = dma.done [#allocation7], 128
    $region53: #{tpu_custom_call.1} parent=1 // pred_fallthru
      _
    // Predicated region
    $region54: #{tpu_custom_call.1} parent=1 // pred_check
      _
    $region55: #{tpu_custom_call.1} parent=1 // pred_check_branch
      %593 = sbr.rel (0) target = $region57
    $region56: #{tpu_custom_call.1} parent=1 // pred_region
      %595 = dma.done [#allocation7], 128
    $region57: #{tpu_custom_call.1} parent=1 // pred_fallthru
      _
    // Predicated region
    $region58: #{tpu_custom_call.1} parent=1 // pred_check
      _
    $region59: #{tpu_custom_call.1} parent=1 // pred_check_branch
      %597 = sbr.rel (0) target = $region61
    $region60: #{tpu_custom_call.1} parent=1 // pred_region
      %599 = dma.done [#allocation10], 128
    $region61: #{tpu_custom_call.1} parent=1 // pred_fallthru
      _
    %600 = vsyncpa [#allocation3], 1
    %601 = vsyncpa [#allocation4], 1
    %602 = vsyncpa [#allocation7], 1
    %603 = vsyncpa [#allocation10], 1

</llo_original>
